<compile_context>
chip_gen: v7x
topology: tpu7x:2x2x1
jax: 0.10.0
libtpu: 0.0.40
codegen_flags: <defaults>
</compile_context>

<pallas_src>
import jax
import jax.numpy as jnp
from jax.experimental import pallas as pl
from jax.experimental.pallas import tpu as pltpu


_VMEM_TILE_BUDGET = 40 * 1024 * 1024   # keep well under v7x's 64 MiB physical VMEM
_VMEM_LIMIT_BYTES = 48 * 1024 * 1024   # raise v5e's 16 MiB scoped-VMEM default
_SPLIT_W2_BYTES = 4 * 1024 * 1024      # W2 >= 4 MiB -> two tiles (one per v7x TC)


def _timestep_embedding_kernel(x_ref, w1_ref, b1_ref, w2_ref, b2_ref, o_ref):
    # linear_1 + SiLU, recomputed per output tile (M = batch is tiny, MXU is idle;
    # keeps grid steps fully independent so the N axis is legitimately "parallel").
    h = jnp.dot(x_ref[...], w1_ref[...], preferred_element_type=jnp.float32)
    h = h + b1_ref[...]                                     # b1 already f32 (1, H)
    # SiLU in f32; reciprocal goes to the EUP's (otherwise free) slot.
    h = h * pl.reciprocal(1.0 + jnp.exp(-h), approx=True)

    # linear_2 on the current N tile of W2: h -> weight dtype for MXU feed, f32 accum.
    out = jnp.dot(h.astype(w2_ref.dtype), w2_ref[...],
                  preferred_element_type=jnp.float32)

    # b2 is resident as an f32 row-table (num_tiles, n_tile); pick this tile's row
    # in-kernel (no per-step bias DMA).
    b2_row = b2_ref[pl.ds(pl.program_id(0), 1), :]           # (1, n_tile)
    o_ref[...] = (out + b2_row).astype(o_ref.dtype)


def _pick_n_tile(B, Din, H, w_bytes, x_bytes):
    """Pick the W2 column-tile width.

    Default: a single grid step (n_tile = H) -- the kernel is launch/DMA-overhead
    bound, so extra grid steps only add fixed cost and smaller (lower-BW) DMAs.
    Exception: if W2 is large, use exactly two tiles so the "parallel" axis can be
    sharded across v7x's two TensorCores (each fetches half of W2).
    Falls back to the largest lane-dense divisor of H that fits the VMEM budget.
    """
    if H % 128 != 0:
        # Full-H block is legal (full-dim block); lane stores are masked -> slower,
        # but correct.  Not expected for SDXL shapes.
        return H

    w2_bytes = H * H * w_bytes
    if w2_bytes >= _SPLIT_W2_BYTES and (H // 2) % 128 == 0:
        preferred = H // 2
    else:
        preferred = H

    # Conservative footprint: assume default double-buffering on every operand.
    resident = 2 * (B * Din * x_bytes + Din * H * w_bytes + 2 * H * 4)
    for n in range(preferred, 0, -128):
        if H % n != 0:
            continue
        tiled = 2 * (H * n * w_bytes + B * n * x_bytes)
        if resident + tiled <= _VMEM_TILE_BUDGET:
            return n
    return 128


def tt_timestep_embedding(sample, w1, b1, w2, b2, *, n_tile=None):
    """Forward of TtTimestepEmbedding.

    sample: (B, Din); w1: (Din, H) (pre-transposed from torch's (H, Din));
    b1: (H,) or (1, H); w2: (H, H) (pre-transposed); b2: (H,) or (1, H).
    """
    B, Din = sample.shape
    H = w1.shape[1]

    if n_tile is None:
        n_tile = _pick_n_tile(B, Din, H,
                              jnp.dtype(w2.dtype).itemsize,
                              jnp.dtype(sample.dtype).itemsize)
    assert H % n_tile == 0
    num_tiles = H // n_tile
    grid = (num_tiles,)

    # Biases handed to the kernel already in f32; b2 as a per-tile row table.
    b1 = jnp.asarray(b1, jnp.float32).reshape(1, H)
    b2 = jnp.asarray(b2, jnp.float32).reshape(num_tiles, n_tile)

    return pl.pallas_call(
        _timestep_embedding_kernel,
        out_shape=jax.ShapeDtypeStruct((B, H), sample.dtype),
        grid=grid,
        in_specs=[
            pl.BlockSpec((B, Din), lambda i: (0, 0)),             # x  : resident
            pl.BlockSpec((Din, H), lambda i: (0, 0)),             # W1 : resident
            pl.BlockSpec((1, H), lambda i: (0, 0)),               # b1 : resident (f32)
            pl.BlockSpec((H, n_tile), lambda i: (0, i)),          # W2 : N-tiled, pipelined
            pl.BlockSpec((num_tiles, n_tile), lambda i: (0, 0)),  # b2 : resident row table
        ],
        out_specs=pl.BlockSpec((B, n_tile), lambda i: (0, i)),
        compiler_params=pltpu.CompilerParams(
            # Single step in the common case; with 2+ tiles v7x shards the W2
            # fetch across its two TensorCores.  Raise the scoped-VMEM cap so
            # v5e's 16 MiB default never rejects the large-tile layout.
            dimension_semantics=("parallel",),
            vmem_limit_bytes=_VMEM_LIMIT_BYTES),
    )(sample, w1, b1, w2, b2)
    # TODO(synk): weights are constant across diffusion steps; a cross-pallas_call
    # weight prefetch (P10: SEMAPHORE + VMEM outputs, has_side_effects=True) would
    # hide all W1/W2 HBM traffic behind preceding layers — biggest remaining lever.


def _reference(sample, w1, b1, w2, b2):
    h = sample.astype(jnp.float32) @ w1.astype(jnp.float32) + jnp.asarray(b1, jnp.float32)
    h = h * jax.nn.sigmoid(h)
    return h @ w2.astype(jnp.float32) + jnp.asarray(b2, jnp.float32)


def _run_case(key, B, Din, H, dtype=jnp.bfloat16, tol=5e-2, n_tile=None):
    k_x, k_w1, k_b1, k_w2, k_b2 = jax.random.split(key, 5)
    sample = jax.random.normal(k_x, (B, Din), dtype=jnp.float32).astype(dtype)

    # PyTorch nn.Linear weights are (out, in); pre-transpose to (in, out).
    w1 = (jax.random.normal(k_w1, (H, Din), dtype=jnp.float32) * 0.05).T.astype(dtype)
    b1 = jax.random.normal(k_b1, (H,), dtype=jnp.float32) * 0.05
    w2 = (jax.random.normal(k_w2, (H, H), dtype=jnp.float32) * 0.05).T.astype(dtype)
    b2 = jax.random.normal(k_b2, (H,), dtype=jnp.float32) * 0.05

    out = jax.block_until_ready(
        tt_timestep_embedding(sample, w1, b1, w2, b2, n_tile=n_tile))
    assert out.shape == (B, H) and out.dtype == dtype

    ref = _reference(sample, w1, b1, w2, b2)
    err = float(jnp.max(jnp.abs(out.astype(jnp.float32) - ref)))
    assert err < tol, f"mismatch vs reference (B={B}, Din={Din}, H={H}): {err}"


if __name__ == "__main__":
    key = jax.random.PRNGKey(0)
    k0, k1, k2 = jax.random.split(key, 3)

    # Small shapes consistent with the module: in_channels=32, time_embed_dim=128, batch=2.
    _run_case(k0, B=2, Din=32, H=128)                  # single-step grid (default)
    _run_case(k1, B=2, Din=32, H=384)                  # auto: collapses to one step
    _run_case(k2, B=2, Din=32, H=384, n_tile=128)      # forced multi-tile path (3 steps)

    print("KERNEL_OK")
</pallas_src>

<mosaic_0001>
module attributes {stable_mosaic.version = 11 : i64} {
  func.func @_timestep_embedding_kernel(%arg0: i32, %arg1: memref<2x32xbf16, #tpu.memory_space<vmem>>, %arg2: memref<32x128xbf16, #tpu.memory_space<vmem>>, %arg3: memref<1x128xf32, #tpu.memory_space<vmem>>, %arg4: memref<128x128xbf16, #tpu.memory_space<vmem>>, %arg5: memref<1x128xf32, #tpu.memory_space<vmem>>, %arg6: memref<2x128xbf16, #tpu.memory_space<vmem>>) attributes {dimension_semantics = [#tpu.dimension_semantics<parallel>], iteration_bounds = array<i64: 1>, scalar_prefetch = 0 : i64, scratch_operands = 0 : i64, tpu.core_type = #tpu.core_type<tc>, window_params = [{pipeline_mode = #tpu.pipeline_mode<synchronous>, transform_indices = @transform_0, window_bounds = array<i64: 2, 32>}, {pipeline_mode = #tpu.pipeline_mode<synchronous>, transform_indices = @transform_1, window_bounds = array<i64: 32, 128>}, {pipeline_mode = #tpu.pipeline_mode<synchronous>, transform_indices = @transform_2, window_bounds = array<i64: 1, 128>}, {transform_indices = @transform_3, window_bounds = array<i64: 128, 128>}, {pipeline_mode = #tpu.pipeline_mode<synchronous>, transform_indices = @transform_4, window_bounds = array<i64: 1, 128>}, {transform_indices = @transform_5, window_bounds = array<i64: 2, 128>}]} {
    %c0 = arith.constant 0 : index
    %c0_0 = arith.constant 0 : index
    %0 = vector.load %arg1[%c0, %c0_0] : memref<2x32xbf16, #tpu.memory_space<vmem>>, vector<2x32xbf16>
    %c0_1 = arith.constant 0 : index
    %c0_2 = arith.constant 0 : index
    %1 = vector.load %arg2[%c0_1, %c0_2] : memref<32x128xbf16, #tpu.memory_space<vmem>>, vector<32x128xbf16>
    %cst = arith.constant dense<0.000000e+00> : vector<2x128xf32>
    %2 = tpu.matmul %0, %1, %cst {dimension_numbers = #tpu.dot_dimension_numbers<[1], [0], [0], [1], [0, 0, 1, 1], [], []>} : vector<2x32xbf16>, vector<32x128xbf16>, vector<2x128xf32> -> vector<2x128xf32>
    %c0_3 = arith.constant 0 : index
    %c0_4 = arith.constant 0 : index
    %3 = vector.load %arg3[%c0_3, %c0_4] : memref<1x128xf32, #tpu.memory_space<vmem>>, vector<1x128xf32>
    %4 = vector.broadcast %3 : vector<1x128xf32> to vector<2x128xf32>
    %5 = arith.addf %2, %4 : vector<2x128xf32>
    %cst_5 = arith.constant 0.000000e+00 : f32
    %6 = vector.broadcast %cst_5 : f32 to vector<2x128xf32>
    %7 = arith.subf %6, %5 : vector<2x128xf32>
    %8 = math.exp %7 : vector<2x128xf32>
    %cst_6 = arith.constant 1.000000e+00 : f32
    %9 = vector.broadcast %cst_6 : f32 to vector<2x128xf32>
    %10 = arith.addf %9, %8 : vector<2x128xf32>
    %11 = tpu.reciprocal %10 {approx = true} : vector<2x128xf32> -> vector<2x128xf32>
    %12 = arith.mulf %5, %11 : vector<2x128xf32>
    %13 = arith.truncf %12 : vector<2x128xf32> to vector<2x128xbf16>
    %c0_7 = arith.constant 0 : index
    %c0_8 = arith.constant 0 : index
    %14 = vector.load %arg4[%c0_7, %c0_8] : memref<128x128xbf16, #tpu.memory_space<vmem>>, vector<128x128xbf16>
    %cst_9 = arith.constant dense<0.000000e+00> : vector<2x128xf32>
    %15 = tpu.matmul %13, %14, %cst_9 {dimension_numbers = #tpu.dot_dimension_numbers<[1], [0], [0], [1], [0, 0, 1, 1], [], []>} : vector<2x128xbf16>, vector<128x128xbf16>, vector<2x128xf32> -> vector<2x128xf32>
    %16 = arith.index_cast %arg0 : i32 to index
    %c0_10 = arith.constant 0 : index
    %17 = vector.load %arg5[%16, %c0_10] : memref<1x128xf32, #tpu.memory_space<vmem>>, vector<1x128xf32>
    %18 = vector.broadcast %17 : vector<1x128xf32> to vector<2x128xf32>
    %19 = arith.addf %15, %18 : vector<2x128xf32>
    %20 = arith.truncf %19 : vector<2x128xf32> to vector<2x128xbf16>
    %c0_11 = arith.constant 0 : index
    %c0_12 = arith.constant 0 : index
    %21 = vector.load %arg6[%c0_11, %c0_12] : memref<2x128xbf16, #tpu.memory_space<vmem>>, vector<2x128xbf16>
    tpu.vector_store %arg6[%c0_11, %c0_12], %20 {strides = array<i32>} : memref<2x128xbf16, #tpu.memory_space<vmem>>, vector<2x128xbf16>,
    return
  }
  func.func @transform_0(%arg0: i32) -> (i32, i32) {
    %c0_i32 = arith.constant 0 : i32
    %c0_i32_0 = arith.constant 0 : i32
    %c0_i32_1 = arith.constant 0 : i32
    return %c0_i32, %c0_i32_0 : i32, i32
  }
  func.func @transform_1(%arg0: i32) -> (i32, i32) {
    %c0_i32 = arith.constant 0 : i32
    %c0_i32_0 = arith.constant 0 : i32
    %c0_i32_1 = arith.constant 0 : i32
    return %c0_i32, %c0_i32_0 : i32, i32
  }
  func.func @transform_2(%arg0: i32) -> (i32, i32) {
    %c0_i32 = arith.constant 0 : i32
    %c0_i32_0 = arith.constant 0 : i32
    %c0_i32_1 = arith.constant 0 : i32
    return %c0_i32, %c0_i32_0 : i32, i32
  }
  func.func @transform_3(%arg0: i32) -> (i32, i32) {
    %c0_i32 = arith.constant 0 : i32
    %c0_i32_0 = arith.constant 0 : i32
    return %c0_i32, %arg0 : i32, i32
  }
  func.func @transform_4(%arg0: i32) -> (i32, i32) {
    %c0_i32 = arith.constant 0 : i32
    %c0_i32_0 = arith.constant 0 : i32
    %c0_i32_1 = arith.constant 0 : i32
    return %c0_i32, %c0_i32_0 : i32, i32
  }
  func.func @transform_5(%arg0: i32) -> (i32, i32) {
    %c0_i32 = arith.constant 0 : i32
    %c0_i32_0 = arith.constant 0 : i32
    return %c0_i32, %arg0 : i32, i32
  }
}

</mosaic_0001>

<llo_original>
// kernel: tpu_custom_call.1
$region0: #{tpu_custom_call.1}
  #allocation0 [shape = 'u32[]', space=smem, size = 0x4, offset = 0x4, fixed_abs, tag = 'smem constant byte address 0x4 - core index']
  #allocation1 [shape = 'u32[144,128]{1,0:T(1,128)}', space=vmem, size = 0x12000, scoped, tag = 'internal scratch']
  %s0 = inlined_call_operand.hbm [shape: bf16[2,32], index: 0, kind: input, shape index: {}]
  %s1 = inlined_call_operand.hbm [shape: bf16[32,128], index: 1, kind: input, shape index: {}]
  %s2 = inlined_call_operand.vmem [shape: f32[1,128], index: 2, kind: input, shape index: {}]
  %s3 = inlined_call_operand.hbm [shape: bf16[128,128], index: 3, kind: input, shape index: {}]
  %s4 = inlined_call_operand.vmem [shape: f32[1,128], index: 4, kind: input, shape index: {}]
  %s5 = inlined_call_operand.hbm [shape: bf16[2,128], index: 5, kind: output, shape index: {}]
  %s6 = sld [smem:[#allocation0]]
  $region42: #{tpu_custom_call.1} parent=0
    _
  %s8 = ssub.s32 1, %s6
  %s9 = scalar_select 0, %s8, %s6
  $region1: #{tpu_custom_call.1} parent=0
    #allocation2 [shape = 'u8[512]{0}', space=vmem, size = 0x400, scoped, tag = 'input window, operand 0, single buffered']
    #allocation3 [shape = 's32[1]{0}', space=sflag, size = 0x4, scoped, tag = 'scoped memory for tpu_custom_call.1']
    #allocation4 [shape = 's32[1]{0}', space=sflag, size = 0x4, scoped, tag = 'scoped memory for tpu_custom_call.1']
    #allocation5 [shape = 'u8[8192]{0}', space=vmem, size = 0x2000, scoped, tag = 'input window, operand 1, single buffered']
    #allocation6 [shape = 's32[1]{0}', space=sflag, size = 0x4, scoped, tag = 'scoped memory for tpu_custom_call.1']
    #allocation7 [shape = 'u8[32768]{0}', space=vmem, size = 0x8000, scoped, tag = 'input window, operand 3, single buffered']
    #allocation8 [shape = 'u8[512]{0}', space=vmem, size = 0x400, scoped, tag = 'output window, operand 0, single buffered']
    %10 = vsyncpa [#allocation3], 0
    %11 = vsyncpa [#allocation6], 0
    %12 = vsyncpa [#allocation4], 0
    // Predicated region
    $region2: #{tpu_custom_call.1} parent=1 // pred_check
      _
    $region3: #{tpu_custom_call.1} parent=1 // pred_check_branch
      %14 = sbr.rel (0) target = $region5
    $region4: #{tpu_custom_call.1} parent=1 // pred_region
      %s16 = ssub.s32 16, 16
      %17 = vsyncadd [#allocation3], %s16
      %s19 = sshll.u32 [#allocation2], 4
      %s20 = int_to_ptr.vmem [resolvable:$true] %s19
      %22 = dma.hbm_to_vmem [thread:$0]  %s0, 16, %s20, [#allocation3]
    $region5: #{tpu_custom_call.1} parent=1 // pred_fallthru
      _
    // Predicated region
    $region6: #{tpu_custom_call.1} parent=1 // pred_check
      _
    $region7: #{tpu_custom_call.1} parent=1 // pred_check_branch
      %24 = sbr.rel (0) target = $region9
    $region8: #{tpu_custom_call.1} parent=1 // pred_region
      %s26 = ssub.s32 256, 256
      %27 = vsyncadd [#allocation6], %s26
      %s28 = sshll.u32 [#allocation5], 4
      %s29 = int_to_ptr.vmem [resolvable:$true] %s28
      %34 = dma.hbm_to_vmem [thread:$0]  %s1, 256, %s29, [#allocation6], 64, 64, 4
    $region9: #{tpu_custom_call.1} parent=1 // pred_fallthru
      _
    // Predicated region
    $region10: #{tpu_custom_call.1} parent=1 // pred_check
      _
    $region11: #{tpu_custom_call.1} parent=1 // pred_check_branch
      %36 = sbr.rel (0) target = $region13
    $region12: #{tpu_custom_call.1} parent=1 // pred_region
      _
    $region13: #{tpu_custom_call.1} parent=1 // pred_fallthru
      _
    // Predicated region
    $region14: #{tpu_custom_call.1} parent=1 // pred_check
      _
    $region15: #{tpu_custom_call.1} parent=1 // pred_check_branch
      %38 = sbr.rel (0) target = $region17
    $region16: #{tpu_custom_call.1} parent=1 // pred_region
      %s40 = ssub.s32 1024, 1024
      %41 = vsyncadd [#allocation6], %s40
      %s42 = sshll.u32 [#allocation7], 4
      %s43 = int_to_ptr.vmem [resolvable:$true] %s42
      %48 = dma.hbm_to_vmem [thread:$0]  %s3, 1024, %s43, [#allocation6], 64, 64, 4
    $region17: #{tpu_custom_call.1} parent=1 // pred_fallthru
      _
    // Predicated region
    $region18: #{tpu_custom_call.1} parent=1 // pred_check
      _
    $region19: #{tpu_custom_call.1} parent=1 // pred_check_branch
      %50 = sbr.rel (0) target = $region21
    $region20: #{tpu_custom_call.1} parent=1 // pred_region
      _
    $region21: #{tpu_custom_call.1} parent=1 // pred_fallthru
      _
    // Predicated region
    $region22: #{tpu_custom_call.1} parent=1 // pred_check
      _
    $region23: #{tpu_custom_call.1} parent=1 // pred_check_branch
      %52 = sbr.rel (0) target = $region25
    $region24: #{tpu_custom_call.1} parent=1 // pred_region
      %53 = dma.done [#allocation3], 16
    $region25: #{tpu_custom_call.1} parent=1 // pred_fallthru
      _
    // Predicated region
    $region26: #{tpu_custom_call.1} parent=1 // pred_check
      _
    $region27: #{tpu_custom_call.1} parent=1 // pred_check_branch
      %55 = sbr.rel (0) target = $region29
    $region28: #{tpu_custom_call.1} parent=1 // pred_region
      %56 = dma.done [#allocation6], 256
    $region29: #{tpu_custom_call.1} parent=1 // pred_fallthru
      _
    // Predicated region
    $region30: #{tpu_custom_call.1} parent=1 // pred_check
      _
    $region31: #{tpu_custom_call.1} parent=1 // pred_check_branch
      %58 = sbr.rel (0) target = $region33
    $region32: #{tpu_custom_call.1} parent=1 // pred_region
      %59 = dma.done [#allocation6], 1024
    $region33: #{tpu_custom_call.1} parent=1 // pred_fallthru
      _
    %v61 = vld [vmem:[#allocation2] sm:$0x1]
    %v62 = vld [vmem:[#allocation5] sm:$0xf]
    %v63 = vld [vmem:[#allocation5 + $0x4] sm:$0xf]
    %v64 = vld [vmem:[#allocation5 + $0x8] sm:$0xf]
    %v65 = vld [vmem:[#allocation5 + $0xc] sm:$0xf]
    %v66 = vld [vmem:[%s2] sm:$0x1]
    %v68 = vlaneseq
    %v69 = vshrl.u32 %v68, 7
    %v70 = vsub.s32 0, %v69
    %v71 = vrot.slane %v66, %v70
    %v77 = vunpack.c.l.b16 %v62
    %v78 = vunpack.c.l.b16 %v63
    %v79 = vunpack.c.l.b16 %v64
    %v80 = vunpack.c.l.b16 %v65
    %v81 = vpack.c.b16 %v78, %v77
    %v82 = vpack.c.b16 %v80, %v79
    %vm85 = vcmask 261120
    %v87 = vsel %vm85, %v61, 0
    %89 = vmatprep.subr.bf16.mxu0 0
    %90 = vmatpush1.bf16.msra.mxu0 %v81
    %91 = vmatprep.subr.bf16.mxu0 0
    %92 = vmatpush1.bf16.msra.mxu0 %v82
    %93 = vmatprep.subr.bf16.mxu0 0
    %94 = vmatpush1.bf16.msra.mxu0 0
    %95 = vmatprep.subr.bf16.mxu0 0
    %96 = vmatpush1.bf16.msra.mxu0 0
    %97 = vmatprep.subr.bf16.mxu0 0
    %98 = vmatpush1.bf16.msra.mxu0 0
    %99 = vmatprep.subr.bf16.mxu0 0
    %100 = vmatpush1.bf16.msra.mxu0 0
    %101 = vmatprep.subr.bf16.mxu0 0
    %102 = vmatpush1.bf16.msra.mxu0 0
    %103 = vmatprep.subr.bf16.mxu0 0
    %104 = vmatpush1.bf16.msra.mxu0 0
    %105 = vmatprep.subr.bf16.mxu0 0
    %106 = vmatpush1.bf16.msra.mxu0 0
    %107 = vmatprep.subr.bf16.mxu0 0
    %108 = vmatpush1.bf16.msra.mxu0 0
    %109 = vmatprep.subr.bf16.mxu0 0
    %110 = vmatpush1.bf16.msra.mxu0 0
    %111 = vmatprep.subr.bf16.mxu0 0
    %112 = vmatpush1.bf16.msra.mxu0 0
    %113 = vmatprep.subr.bf16.mxu0 0
    %114 = vmatpush1.bf16.msra.mxu0 0
    %115 = vmatprep.subr.bf16.mxu0 0
    %116 = vmatpush1.bf16.msra.mxu0 0
    %117 = vmatprep.subr.bf16.mxu0 0
    %118 = vmatpush1.bf16.msra.mxu0 0
    %119 = vmatprep.subr.bf16.mxu0 0
    %120 = vmatpush1.bf16.msra.mxu0 0
    %121 = vmatprep.mubr.bf16.mxu0 0
    %122 = vmatmul.mubr.bf16.gmra.mrb[0].mxu0 %v87
    %v123 = vpop.f32.mrb[0].mxu0
    %v124 = vadd.f32 %v71, %v123
    %v125 = vpop.f32.mrb[0].mxu0
    %v126 = vpop.f32.mrb[0].mxu0
    %v127 = vpop.f32.mrb[0].mxu0
    %128 = vdwg.mxu0
    %v129 = vsub.f32 0.0, %v124
    %v130 = vmul.f32 %v129, 1.442695
    %v131 = vpow.pop %v130
    %v132 = vadd.f32 %v131, 1.0
    %v133 = vrcp.pop %v132
    %v134 = vmul.f32 %v124, %v133
    %v135 = vpack.c.bf16 %v134, %v134
    %v136 = vld [vmem:[#allocation7] sm:$0xf]
    %v137 = vld [vmem:[#allocation7 + $0x4] sm:$0xf]
    %v138 = vld [vmem:[#allocation7 + $0x8] sm:$0xf]
    %v139 = vld [vmem:[#allocation7 + $0xc] sm:$0xf]
    %v140 = vld [vmem:[#allocation7 + $0x10] sm:$0xf]
    %v141 = vld [vmem:[#allocation7 + $0x14] sm:$0xf]
    %v142 = vld [vmem:[#allocation7 + $0x18] sm:$0xf]
    %v143 = vld [vmem:[#allocation7 + $0x1c] sm:$0xf]
    %v144 = vld [vmem:[#allocation7 + $0x20] sm:$0xf]
    %v145 = vld [vmem:[#allocation7 + $0x24] sm:$0xf]
    %v146 = vld [vmem:[#allocation7 + $0x28] sm:$0xf]
    %v147 = vld [vmem:[#allocation7 + $0x2c] sm:$0xf]
    %v148 = vld [vmem:[#allocation7 + $0x30] sm:$0xf]
    %v149 = vld [vmem:[#allocation7 + $0x34] sm:$0xf]
    %v150 = vld [vmem:[#allocation7 + $0x38] sm:$0xf]
    %v151 = vld [vmem:[#allocation7 + $0x3c] sm:$0xf]
    %v152 = vld [vmem:[%s4] sm:$0x1]
    %v154 = vlaneseq
    %v155 = vshrl.u32 %v154, 7
    %v156 = vsub.s32 0, %v155
    %v157 = vrot.slane %v152, %v156
    %v175 = vunpack.c.l.b16 %v136
    %v176 = vunpack.c.l.b16 %v137
    %v177 = vunpack.c.l.b16 %v138
    %v178 = vunpack.c.l.b16 %v139
    %v179 = vunpack.c.l.b16 %v140
    %v180 = vunpack.c.l.b16 %v141
    %v181 = vunpack.c.l.b16 %v142
    %v182 = vunpack.c.l.b16 %v143
    %v183 = vunpack.c.l.b16 %v144
    %v184 = vunpack.c.l.b16 %v145
    %v185 = vunpack.c.l.b16 %v146
    %v186 = vunpack.c.l.b16 %v147
    %v187 = vunpack.c.l.b16 %v148
    %v188 = vunpack.c.l.b16 %v149
    %v189 = vunpack.c.l.b16 %v150
    %v190 = vunpack.c.l.b16 %v151
    %v191 = vpack.c.b16 %v176, %v175
    %v192 = vpack.c.b16 %v178, %v177
    %v193 = vpack.c.b16 %v180, %v179
    %v194 = vpack.c.b16 %v182, %v181
    %v195 = vpack.c.b16 %v184, %v183
    %v196 = vpack.c.b16 %v186, %v185
    %v197 = vpack.c.b16 %v188, %v187
    %v198 = vpack.c.b16 %v190, %v189
    %207 = vmatprep.subr.bf16.mxu0 0
    %208 = vmatpush1.bf16.msra.mxu0 %v191
    %209 = vmatprep.subr.bf16.mxu0 0
    %210 = vmatpush1.bf16.msra.mxu0 %v192
    %211 = vmatprep.subr.bf16.mxu0 0
    %212 = vmatpush1.bf16.msra.mxu0 %v193
    %213 = vmatprep.subr.bf16.mxu0 0
    %214 = vmatpush1.bf16.msra.mxu0 %v194
    %215 = vmatprep.subr.bf16.mxu0 0
    %216 = vmatpush1.bf16.msra.mxu0 %v195
    %217 = vmatprep.subr.bf16.mxu0 0
    %218 = vmatpush1.bf16.msra.mxu0 %v196
    %219 = vmatprep.subr.bf16.mxu0 0
    %220 = vmatpush1.bf16.msra.mxu0 %v197
    %221 = vmatprep.subr.bf16.mxu0 0
    %222 = vmatpush1.bf16.msra.mxu0 %v198
    %223 = vmatprep.subr.bf16.mxu0 0
    %224 = vmatpush1.bf16.msra.mxu0 0
    %225 = vmatprep.subr.bf16.mxu0 0
    %226 = vmatpush1.bf16.msra.mxu0 0
    %227 = vmatprep.subr.bf16.mxu0 0
    %228 = vmatpush1.bf16.msra.mxu0 0
    %229 = vmatprep.subr.bf16.mxu0 0
    %230 = vmatpush1.bf16.msra.mxu0 0
    %231 = vmatprep.subr.bf16.mxu0 0
    %232 = vmatpush1.bf16.msra.mxu0 0
    %233 = vmatprep.subr.bf16.mxu0 0
    %234 = vmatpush1.bf16.msra.mxu0 0
    %235 = vmatprep.subr.bf16.mxu0 0
    %236 = vmatpush1.bf16.msra.mxu0 0
    %237 = vmatprep.subr.bf16.mxu0 0
    %238 = vmatpush1.bf16.msra.mxu0 0
    %239 = vmatprep.mubr.bf16.mxu0 0
    %240 = vmatmul.mubr.bf16.gmra.mrb[0].mxu0 %v135
    %v241 = vpop.f32.mrb[0].mxu0
    %v242 = vadd.f32 %v157, %v241
    %v243 = vpop.f32.mrb[0].mxu0
    %v244 = vpop.f32.mrb[0].mxu0
    %v245 = vpop.f32.mrb[0].mxu0
    %246 = vdwg.mxu0
    %v247 = vpack.c.bf16 %v242, %v242
    %248 = vst [vmem:[#allocation8] sm:$0x1] %v247
    // Predicated region
    $region34: #{tpu_custom_call.1} parent=1 // pred_check
      _
    $region35: #{tpu_custom_call.1} parent=1 // pred_check_branch
      %250 = sbr.rel (0) target = $region37
    $region36: #{tpu_custom_call.1} parent=1 // pred_region
      %s252 = ssub.s32 16, 16
      %253 = vsyncadd [#allocation4], %s252
      %s255 = sshll.u32 [#allocation8], 4
      %s256 = int_to_ptr.vmem [resolvable:$true] %s255
      %258 = dma.vmem_to_hbm [thread:$0]  %s256, 16, %s5, [#allocation4]
    $region37: #{tpu_custom_call.1} parent=1 // pred_fallthru
      _
    // Predicated region
    $region38: #{tpu_custom_call.1} parent=1 // pred_check
      _
    $region39: #{tpu_custom_call.1} parent=1 // pred_check_branch
      %260 = sbr.rel (0) target = $region41
    $region40: #{tpu_custom_call.1} parent=1 // pred_region
      %261 = dma.done [#allocation4], 16
    $region41: #{tpu_custom_call.1} parent=1 // pred_fallthru
      _
    %262 = vsyncpa [#allocation3], 1
    %263 = vsyncpa [#allocation6], 1
    %264 = vsyncpa [#allocation4], 1

</llo_original>
